<compile_context>
chip_gen: v7x
topology: tpu7x:2x2x1
jax: 0.10.0
libtpu: 0.0.40
codegen_flags: <defaults>
</compile_context>

<pallas_src>
import functools
import math

import jax
import jax.numpy as jnp
from jax.experimental import pallas as pl
from jax.experimental.pallas import tpu as pltpu

LANE = 128


def ss_vae_kernel(x_ref, eps_ref,
                  w_enc1_ref, b_enc1_ref,
                  wy2_ref, by2_ref,
                  wz2mu_ref, bz2mu_ref, wz2lv_ref, bz2lv_ref,
                  wd1z_ref, wd1p_ref, bd1_ref, wd2_ref, bd2_ref,
                  out_ref, zparams_ref, pi_ref,
                  *, h_sz, z_sz):
    f32 = jnp.float32
    bf16 = jnp.bfloat16

    x = x_ref[...]                                            # bf16 [tb, IMG]

    # ---- fused encoder first layers: [fc_y1 | fc_z1] in one MXU pass --------
    h = jax.nn.softplus(
        jnp.dot(x, w_enc1_ref[...], preferred_element_type=f32)
        + b_enc1_ref[...])                                    # f32 [tb, 2H]
    h_y = h[:, :h_sz]                                         # lane-128 split: free
    h_z = h[:, h_sz:]

    # ---- classifier head: softmax over 128-lane padded logits ---------------
    # padded lanes carry a -1e30 bias -> exp underflows to exactly 0 mass
    logits = (jnp.dot(h_y.astype(bf16), wy2_ref[...], preferred_element_type=f32)
              + by2_ref[...])
    logits = logits - jnp.max(logits, axis=1, keepdims=True)
    e = jnp.exp(logits)
    pi = e * pl.reciprocal(jnp.sum(e, axis=1, keepdims=True), approx=True)
    pi_ref[...] = pi.astype(pi_ref.dtype)                     # lane-dense store

    # ---- encoder z head: mu / logvar as separate matmuls (no mid-vreg slice)
    h_zb = h_z.astype(bf16)
    mu = (jnp.dot(h_zb, wz2mu_ref[...], preferred_element_type=f32)
          + bz2mu_ref[...])
    logvar = (jnp.dot(h_zb, wz2lv_ref[...], preferred_element_type=f32)
              + bz2lv_ref[...])
    zparams_ref[:, :z_sz] = mu.astype(zparams_ref.dtype)
    zparams_ref[:, z_sz:] = logvar.astype(zparams_ref.dtype)

    # ---- reparameterization: z = mu + eps * exp(logvar / 2) -----------------
    z = mu + eps_ref[...] * jnp.exp(logvar * 0.5)

    # ---- decoder: cat([z, pi]) handled as split matmul ----------------------
    h_d = jax.nn.softplus(
        jnp.dot(z.astype(bf16), wd1z_ref[...], preferred_element_type=f32)
        + jnp.dot(pi.astype(bf16), wd1p_ref[...], preferred_element_type=f32)
        + bd1_ref[...])
    out = jax.nn.sigmoid(
        jnp.dot(h_d.astype(bf16), wd2_ref[...], preferred_element_type=f32)
        + bd2_ref[...])
    out_ref[...] = out.astype(out_ref.dtype)


def _pick_tile_b(B):
    for tb in (512, 256, 128, 64, 32, 16, 8):
        if B % tb == 0:
            return tb
    return B  # tiny/odd batch: one block spanning the whole batch dim


def ss_vae_forward(x, eps, params, *, num_classes):
    """params: dict of f32 weights in PyTorch layout ([in, out] matrices, [1, out] biases).
    Returns (out, z_params, pi) with shapes (B, IMG), (B, 2Z), (B, C)."""
    B, IMG = x.shape
    Z = eps.shape[1]
    H = params["wy1"].shape[1]
    C = num_classes
    Cp = max(LANE, ((C + LANE - 1) // LANE) * LANE)           # pad classes to lane width

    f32, bf16 = jnp.float32, jnp.bfloat16

    # ---- one-time parameter layout plumbing (wrapper side) ------------------
    w_enc1 = jnp.concatenate([params["wy1"], params["wz1"]], axis=1).astype(bf16)
    b_enc1 = jnp.concatenate([params["by1"], params["bz1"]], axis=1).astype(f32)
    wy2 = jnp.zeros((H, Cp), f32).at[:, :C].set(params["wy2"]).astype(bf16)
    by2 = jnp.full((1, Cp), -1e30, f32).at[:, :C].set(params["by2"])
    wz2mu = params["wz2"][:, :Z].astype(bf16)
    wz2lv = params["wz2"][:, Z:].astype(bf16)
    bz2mu = params["bz2"][:, :Z].astype(f32)
    bz2lv = params["bz2"][:, Z:].astype(f32)
    wd1z = params["wd1"][:Z, :].astype(bf16)
    wd1p = jnp.zeros((Cp, H), f32).at[:C, :].set(params["wd1"][Z:, :]).astype(bf16)
    bd1 = params["bd1"].astype(f32)
    wd2 = params["wd2"].astype(bf16)
    bd2 = params["bd2"].astype(f32)

    x_b = x.astype(bf16)
    eps_f = eps.astype(f32)

    weight_args = (w_enc1, b_enc1, wy2, by2, wz2mu, bz2mu, wz2lv, bz2lv,
                   wd1z, wd1p, bd1, wd2, bd2)

    TB = _pick_tile_b(B)
    grid = (B // TB,)

    def batched(cols):
        return pl.BlockSpec((TB, cols), lambda i: (i, 0))

    def resident(shape):
        return pl.BlockSpec(shape, lambda i: (0,) * len(shape))

    in_specs = ([batched(IMG), batched(Z)]
                + [resident(tuple(w.shape)) for w in weight_args])

    out_shapes = (
        jax.ShapeDtypeStruct((B, IMG), f32),       # out
        jax.ShapeDtypeStruct((B, 2 * Z), f32),     # z_params
        jax.ShapeDtypeStruct((B, Cp), f32),        # pi (lane-padded)
    )
    out_specs = (batched(IMG), batched(2 * Z), batched(Cp))

    flops = 2 * B * (IMG * 2 * H + H * Cp + 2 * H * Z + Z * H + Cp * H + H * IMG)
    transcendentals = B * (6 * H + Cp + Z + IMG)
    bytes_accessed = (
        sum(int(a.size) * a.dtype.itemsize for a in (x_b, eps_f) + weight_args)
        + sum(math.prod(s.shape) * jnp.dtype(s.dtype).itemsize for s in out_shapes))

    kernel = functools.partial(ss_vae_kernel, h_sz=H, z_sz=Z)

    out, z_params, pi_pad = pl.pallas_call(
        kernel,
        out_shape=out_shapes,
        grid=grid,
        in_specs=in_specs,
        out_specs=out_specs,
        compiler_params=pltpu.CompilerParams(
            dimension_semantics=("parallel",)),
        cost_estimate=pl.CostEstimate(
            flops=flops,
            transcendentals=transcendentals,
            bytes_accessed=bytes_accessed),
    )(x_b, eps_f, *weight_args)

    return out, z_params, pi_pad[:, :C]


def make_params(key, img_size, h_sz, z_sz, num_classes):
    """Deterministic synthetic init (PyTorch-like fan-in scale), PyTorch layout."""
    def lin(k, fan_in, fan_out):
        k1, k2 = jax.random.split(k)
        bound = 1.0 / math.sqrt(fan_in)
        w = jax.random.uniform(k1, (fan_in, fan_out), jnp.float32, -bound, bound)
        b = jax.random.uniform(k2, (1, fan_out), jnp.float32, -bound, bound)
        return w, b

    keys = jax.random.split(key, 6)
    wy1, by1 = lin(keys[0], img_size, h_sz)
    wy2, by2 = lin(keys[1], h_sz, num_classes)
    wz1, bz1 = lin(keys[2], img_size, h_sz)
    wz2, bz2 = lin(keys[3], h_sz, 2 * z_sz)
    wd1, bd1 = lin(keys[4], z_sz + num_classes, h_sz)   # decoder fc1 on cat([z, pi])
    wd2, bd2 = lin(keys[5], h_sz, img_size)
    return dict(wy1=wy1, by1=by1, wy2=wy2, by2=by2,
                wz1=wz1, bz1=bz1, wz2=wz2, bz2=bz2,
                wd1=wd1, bd1=bd1, wd2=wd2, bd2=bd2)


def ss_vae_ref(x, eps, p):
    """Pure-JAX f32 reference matching the PyTorch forward."""
    h_y = jax.nn.softplus(x @ p["wy1"] + p["by1"])
    pi = jax.nn.softmax(h_y @ p["wy2"] + p["by2"], axis=1)
    h_z = jax.nn.softplus(x @ p["wz1"] + p["bz1"])
    z_params = h_z @ p["wz2"] + p["bz2"]
    Z = z_params.shape[1] // 2
    mu, logvar = z_params[:, :Z], z_params[:, Z:]
    z = mu + eps * jnp.exp(logvar * 0.5)
    h_d = jax.nn.softplus(jnp.concatenate([z, pi], axis=1) @ p["wd1"] + p["bd1"])
    out = jax.nn.sigmoid(h_d @ p["wd2"] + p["bd2"])
    return out, z_params, pi


if __name__ == "__main__":
    # Small shapes consistent with the flattened-image forward pass.
    B, IMG, H, Z, C = 8, 256, 128, 64, 16

    key = jax.random.PRNGKey(0)
    k_x, k_eps, k_p = jax.random.split(key, 3)
    x = jax.random.uniform(k_x, (B, IMG), jnp.float32)     # "image" in [0, 1]
    eps = jax.random.normal(k_eps, (B, Z), jnp.float32)    # reparam noise (kernel input)
    params = make_params(k_p, IMG, H, Z, C)

    out, z_params, pi = ss_vae_forward(x, eps, params, num_classes=C)
    jax.block_until_ready((out, z_params, pi))

    # Correctness vs. f32 reference.  Tolerance loosened deliberately: the kernel
    # runs its matmuls with bf16 inputs (f32 accumulation) per the perf review.
    out_r, zp_r, pi_r = ss_vae_ref(x, eps, params)
    assert jnp.allclose(out, out_r, atol=5e-2, rtol=5e-2), "out mismatch"
    assert jnp.allclose(z_params, zp_r, atol=5e-2, rtol=5e-2), "z_params mismatch"
    assert jnp.allclose(pi, pi_r, atol=5e-2, rtol=5e-2), "pi mismatch"
    assert out.shape == (B, IMG) and z_params.shape == (B, 2 * Z) and pi.shape == (B, C)

    print("KERNEL_OK")
</pallas_src>

<mosaic_0001>
module attributes {stable_mosaic.version = 11 : i64} {
  func.func @ss_vae_kernel(%arg0: i32, %arg1: memref<8x256xbf16, #tpu.memory_space<vmem>>, %arg2: memref<8x64xf32, #tpu.memory_space<vmem>>, %arg3: memref<256x256xbf16, #tpu.memory_space<vmem>>, %arg4: memref<1x256xf32, #tpu.memory_space<vmem>>, %arg5: memref<128x128xbf16, #tpu.memory_space<vmem>>, %arg6: memref<1x128xf32, #tpu.memory_space<vmem>>, %arg7: memref<128x64xbf16, #tpu.memory_space<vmem>>, %arg8: memref<1x64xf32, #tpu.memory_space<vmem>>, %arg9: memref<128x64xbf16, #tpu.memory_space<vmem>>, %arg10: memref<1x64xf32, #tpu.memory_space<vmem>>, %arg11: memref<64x128xbf16, #tpu.memory_space<vmem>>, %arg12: memref<128x128xbf16, #tpu.memory_space<vmem>>, %arg13: memref<1x128xf32, #tpu.memory_space<vmem>>, %arg14: memref<128x256xbf16, #tpu.memory_space<vmem>>, %arg15: memref<1x256xf32, #tpu.memory_space<vmem>>, %arg16: memref<8x256xf32, #tpu.memory_space<vmem>>, %arg17: memref<8x128xf32, #tpu.memory_space<vmem>>, %arg18: memref<8x128xf32, #tpu.memory_space<vmem>>) attributes {dimension_semantics = [#tpu.dimension_semantics<parallel>], iteration_bounds = array<i64: 1>, scalar_prefetch = 0 : i64, scratch_operands = 0 : i64, tpu.core_type = #tpu.core_type<tc>, window_params = [{transform_indices = @transform_0, window_bounds = array<i64: 8, 256>}, {transform_indices = @transform_1, window_bounds = array<i64: 8, 64>}, {pipeline_mode = #tpu.pipeline_mode<synchronous>, transform_indices = @transform_2, window_bounds = array<i64: 256, 256>}, {pipeline_mode = #tpu.pipeline_mode<synchronous>, transform_indices = @transform_3, window_bounds = array<i64: 1, 256>}, {pipeline_mode = #tpu.pipeline_mode<synchronous>, transform_indices = @transform_4, window_bounds = array<i64: 128, 128>}, {pipeline_mode = #tpu.pipeline_mode<synchronous>, transform_indices = @transform_5, window_bounds = array<i64: 1, 128>}, {pipeline_mode = #tpu.pipeline_mode<synchronous>, transform_indices = @transform_6, window_bounds = array<i64: 128, 64>}, {pipeline_mode = #tpu.pipeline_mode<synchronous>, transform_indices = @transform_7, window_bounds = array<i64: 1, 64>}, {pipeline_mode = #tpu.pipeline_mode<synchronous>, transform_indices = @transform_8, window_bounds = array<i64: 128, 64>}, {pipeline_mode = #tpu.pipeline_mode<synchronous>, transform_indices = @transform_9, window_bounds = array<i64: 1, 64>}, {pipeline_mode = #tpu.pipeline_mode<synchronous>, transform_indices = @transform_10, window_bounds = array<i64: 64, 128>}, {pipeline_mode = #tpu.pipeline_mode<synchronous>, transform_indices = @transform_11, window_bounds = array<i64: 128, 128>}, {pipeline_mode = #tpu.pipeline_mode<synchronous>, transform_indices = @transform_12, window_bounds = array<i64: 1, 128>}, {pipeline_mode = #tpu.pipeline_mode<synchronous>, transform_indices = @transform_13, window_bounds = array<i64: 128, 256>}, {pipeline_mode = #tpu.pipeline_mode<synchronous>, transform_indices = @transform_14, window_bounds = array<i64: 1, 256>}, {transform_indices = @transform_15, window_bounds = array<i64: 8, 256>}, {transform_indices = @transform_16, window_bounds = array<i64: 8, 128>}, {transform_indices = @transform_17, window_bounds = array<i64: 8, 128>}]} {
    %c0 = arith.constant 0 : index
    %c0_0 = arith.constant 0 : index
    %0 = vector.load %arg1[%c0, %c0_0] : memref<8x256xbf16, #tpu.memory_space<vmem>>, vector<8x256xbf16>
    %c0_1 = arith.constant 0 : index
    %c0_2 = arith.constant 0 : index
    %1 = vector.load %arg3[%c0_1, %c0_2] : memref<256x256xbf16, #tpu.memory_space<vmem>>, vector<256x256xbf16>
    %cst = arith.constant dense<0.000000e+00> : vector<8x256xf32>
    %2 = tpu.matmul %0, %1, %cst {dimension_numbers = #tpu.dot_dimension_numbers<[1], [0], [0], [1], [0, 0, 1, 1], [], []>} : vector<8x256xbf16>, vector<256x256xbf16>, vector<8x256xf32> -> vector<8x256xf32>
    %c0_3 = arith.constant 0 : index
    %c0_4 = arith.constant 0 : index
    %3 = vector.load %arg4[%c0_3, %c0_4] : memref<1x256xf32, #tpu.memory_space<vmem>>, vector<1x256xf32>
    %4 = vector.broadcast %3 : vector<1x256xf32> to vector<8x256xf32>
    %5 = arith.addf %2, %4 : vector<8x256xf32>
    %cst_5 = arith.constant 0.000000e+00 : f32
    %6 = vector.broadcast %cst_5 : f32 to vector<8x256xf32>
    %7 = arith.maximumf %5, %6 : vector<8x256xf32>
    %8 = vector.broadcast %cst_5 : f32 to vector<8x256xf32>
    %9 = arith.subf %5, %8 : vector<8x256xf32>
    %10 = arith.cmpf one, %9, %9 : vector<8x256xf32>
    %11 = vector.broadcast %cst_5 : f32 to vector<8x256xf32>
    %12 = arith.addf %5, %11 : vector<8x256xf32>
    %13 = math.absf %9 : vector<8x256xf32>
    %cst_6 = arith.constant 0.000000e+00 : f32
    %14 = vector.broadcast %cst_6 : f32 to vector<8x256xf32>
    %15 = arith.subf %14, %13 : vector<8x256xf32>
    %16 = math.exp %15 : vector<8x256xf32>
    %17 = math.log1p %16 : vector<8x256xf32>
    %18 = arith.addf %7, %17 : vector<8x256xf32>
    %19 = arith.select %10, %12, %18 : vector<8x256xi1>, vector<8x256xf32>
    %20 = vector.extract_strided_slice %19 {offsets = [0, 0], sizes = [8, 128], strides = [1, 1]} : vector<8x256xf32> to vector<8x128xf32>
    %21 = vector.extract_strided_slice %19 {offsets = [0, 128], sizes = [8, 128], strides = [1, 1]} : vector<8x256xf32> to vector<8x128xf32>
    %22 = arith.truncf %20 : vector<8x128xf32> to vector<8x128xbf16>
    %c0_7 = arith.constant 0 : index
    %c0_8 = arith.constant 0 : index
    %23 = vector.load %arg5[%c0_7, %c0_8] : memref<128x128xbf16, #tpu.memory_space<vmem>>, vector<128x128xbf16>
    %cst_9 = arith.constant dense<0.000000e+00> : vector<8x128xf32>
    %24 = tpu.matmul %22, %23, %cst_9 {dimension_numbers = #tpu.dot_dimension_numbers<[1], [0], [0], [1], [0, 0, 1, 1], [], []>} : vector<8x128xbf16>, vector<128x128xbf16>, vector<8x128xf32> -> vector<8x128xf32>
    %c0_10 = arith.constant 0 : index
    %c0_11 = arith.constant 0 : index
    %25 = vector.load %arg6[%c0_10, %c0_11] : memref<1x128xf32, #tpu.memory_space<vmem>>, vector<1x128xf32>
    %26 = vector.broadcast %25 : vector<1x128xf32> to vector<8x128xf32>
    %27 = arith.addf %24, %26 : vector<8x128xf32>
    %cst_12 = arith.constant dense<0xFF800000> : vector<8xf32>
    %28 = vector.multi_reduction <maximumf>, %27, %cst_12 [1] : vector<8x128xf32> to vector<8xf32>
    %29 = vector.shape_cast %28 : vector<8xf32> to vector<8x1xf32>
    %30 = vector.broadcast %29 : vector<8x1xf32> to vector<8x128xf32>
    %31 = arith.subf %27, %30 : vector<8x128xf32>
    %32 = math.exp %31 : vector<8x128xf32>
    %cst_13 = arith.constant dense<0.000000e+00> : vector<8xf32>
    %33 = vector.multi_reduction <add>, %32, %cst_13 [1] : vector<8x128xf32> to vector<8xf32>
    %34 = vector.shape_cast %33 : vector<8xf32> to vector<8x1xf32>
    %35 = tpu.reciprocal %34 {approx = true} : vector<8x1xf32> -> vector<8x1xf32>
    %36 = vector.broadcast %35 : vector<8x1xf32> to vector<8x128xf32>
    %37 = arith.mulf %32, %36 : vector<8x128xf32>
    %c0_14 = arith.constant 0 : index
    %c0_15 = arith.constant 0 : index
    %38 = vector.load %arg18[%c0_14, %c0_15] : memref<8x128xf32, #tpu.memory_space<vmem>>, vector<8x128xf32>
    tpu.vector_store %arg18[%c0_14, %c0_15], %37 {strides = array<i32>} : memref<8x128xf32, #tpu.memory_space<vmem>>, vector<8x128xf32>,
    %39 = arith.truncf %21 : vector<8x128xf32> to vector<8x128xbf16>
    %c0_16 = arith.constant 0 : index
    %c0_17 = arith.constant 0 : index
    %40 = vector.load %arg7[%c0_16, %c0_17] : memref<128x64xbf16, #tpu.memory_space<vmem>>, vector<128x64xbf16>
    %cst_18 = arith.constant dense<0.000000e+00> : vector<8x64xf32>
    %41 = tpu.matmul %39, %40, %cst_18 {dimension_numbers = #tpu.dot_dimension_numbers<[1], [0], [0], [1], [0, 0, 1, 1], [], []>} : vector<8x128xbf16>, vector<128x64xbf16>, vector<8x64xf32> -> vector<8x64xf32>
    %c0_19 = arith.constant 0 : index
    %c0_20 = arith.constant 0 : index
    %42 = vector.load %arg8[%c0_19, %c0_20] : memref<1x64xf32, #tpu.memory_space<vmem>>, vector<1x64xf32>
    %43 = vector.broadcast %42 : vector<1x64xf32> to vector<8x64xf32>
    %44 = arith.addf %41, %43 : vector<8x64xf32>
    %c0_21 = arith.constant 0 : index
    %c0_22 = arith.constant 0 : index
    %45 = vector.load %arg9[%c0_21, %c0_22] : memref<128x64xbf16, #tpu.memory_space<vmem>>, vector<128x64xbf16>
    %cst_23 = arith.constant dense<0.000000e+00> : vector<8x64xf32>
    %46 = tpu.matmul %39, %45, %cst_23 {dimension_numbers = #tpu.dot_dimension_numbers<[1], [0], [0], [1], [0, 0, 1, 1], [], []>} : vector<8x128xbf16>, vector<128x64xbf16>, vector<8x64xf32> -> vector<8x64xf32>
    %c0_24 = arith.constant 0 : index
    %c0_25 = arith.constant 0 : index
    %47 = vector.load %arg10[%c0_24, %c0_25] : memref<1x64xf32, #tpu.memory_space<vmem>>, vector<1x64xf32>
    %48 = vector.broadcast %47 : vector<1x64xf32> to vector<8x64xf32>
    %49 = arith.addf %46, %48 : vector<8x64xf32>
    %c0_26 = arith.constant 0 : index
    %c0_27 = arith.constant 0 : index
    %50 = vector.load %arg17[%c0_26, %c0_27] : memref<8x128xf32, #tpu.memory_space<vmem>>, vector<8x64xf32>
    tpu.vector_store %arg17[%c0_26, %c0_27], %44 {strides = array<i32>} : memref<8x128xf32, #tpu.memory_space<vmem>>, vector<8x64xf32>,
    %c0_28 = arith.constant 0 : index
    %c64 = arith.constant 64 : index
    %51 = vector.load %arg17[%c0_28, %c64] : memref<8x128xf32, #tpu.memory_space<vmem>>, vector<8x64xf32>
    tpu.vector_store %arg17[%c0_28, %c64], %49 {strides = array<i32>} : memref<8x128xf32, #tpu.memory_space<vmem>>, vector<8x64xf32>,
    %c0_29 = arith.constant 0 : index
    %c0_30 = arith.constant 0 : index
    %52 = vector.load %arg2[%c0_29, %c0_30] : memref<8x64xf32, #tpu.memory_space<vmem>>, vector<8x64xf32>
    %cst_31 = arith.constant 5.000000e-01 : f32
    %53 = vector.broadcast %cst_31 : f32 to vector<8x64xf32>
    %54 = arith.mulf %49, %53 : vector<8x64xf32>
    %55 = math.exp %54 : vector<8x64xf32>
    %56 = arith.mulf %52, %55 : vector<8x64xf32>
    %57 = arith.addf %44, %56 : vector<8x64xf32>
    %58 = arith.truncf %57 : vector<8x64xf32> to vector<8x64xbf16>
    %c0_32 = arith.constant 0 : index
    %c0_33 = arith.constant 0 : index
    %59 = vector.load %arg11[%c0_32, %c0_33] : memref<64x128xbf16, #tpu.memory_space<vmem>>, vector<64x128xbf16>
    %cst_34 = arith.constant dense<0.000000e+00> : vector<8x128xf32>
    %60 = tpu.matmul %58, %59, %cst_34 {dimension_numbers = #tpu.dot_dimension_numbers<[1], [0], [0], [1], [0, 0, 1, 1], [], []>} : vector<8x64xbf16>, vector<64x128xbf16>, vector<8x128xf32> -> vector<8x128xf32>
    %61 = arith.truncf %37 : vector<8x128xf32> to vector<8x128xbf16>
    %c0_35 = arith.constant 0 : index
    %c0_36 = arith.constant 0 : index
    %62 = vector.load %arg12[%c0_35, %c0_36] : memref<128x128xbf16, #tpu.memory_space<vmem>>, vector<128x128xbf16>
    %cst_37 = arith.constant dense<0.000000e+00> : vector<8x128xf32>
    %63 = tpu.matmul %61, %62, %cst_37 {dimension_numbers = #tpu.dot_dimension_numbers<[1], [0], [0], [1], [0, 0, 1, 1], [], []>} : vector<8x128xbf16>, vector<128x128xbf16>, vector<8x128xf32> -> vector<8x128xf32>
    %64 = arith.addf %60, %63 : vector<8x128xf32>
    %c0_38 = arith.constant 0 : index
    %c0_39 = arith.constant 0 : index
    %65 = vector.load %arg13[%c0_38, %c0_39] : memref<1x128xf32, #tpu.memory_space<vmem>>, vector<1x128xf32>
    %66 = vector.broadcast %65 : vector<1x128xf32> to vector<8x128xf32>
    %67 = arith.addf %64, %66 : vector<8x128xf32>
    %cst_40 = arith.constant 0.000000e+00 : f32
    %68 = vector.broadcast %cst_40 : f32 to vector<8x128xf32>
    %69 = arith.maximumf %67, %68 : vector<8x128xf32>
    %70 = vector.broadcast %cst_40 : f32 to vector<8x128xf32>
    %71 = arith.subf %67, %70 : vector<8x128xf32>
    %72 = arith.cmpf one, %71, %71 : vector<8x128xf32>
    %73 = vector.broadcast %cst_40 : f32 to vector<8x128xf32>
    %74 = arith.addf %67, %73 : vector<8x128xf32>
    %75 = math.absf %71 : vector<8x128xf32>
    %cst_41 = arith.constant 0.000000e+00 : f32
    %76 = vector.broadcast %cst_41 : f32 to vector<8x128xf32>
    %77 = arith.subf %76, %75 : vector<8x128xf32>
    %78 = math.exp %77 : vector<8x128xf32>
    %79 = math.log1p %78 : vector<8x128xf32>
    %80 = arith.addf %69, %79 : vector<8x128xf32>
    %81 = arith.select %72, %74, %80 : vector<8x128xi1>, vector<8x128xf32>
    %82 = arith.truncf %81 : vector<8x128xf32> to vector<8x128xbf16>
    %c0_42 = arith.constant 0 : index
    %c0_43 = arith.constant 0 : index
    %83 = vector.load %arg14[%c0_42, %c0_43] : memref<128x256xbf16, #tpu.memory_space<vmem>>, vector<128x256xbf16>
    %cst_44 = arith.constant dense<0.000000e+00> : vector<8x256xf32>
    %84 = tpu.matmul %82, %83, %cst_44 {dimension_numbers = #tpu.dot_dimension_numbers<[1], [0], [0], [1], [0, 0, 1, 1], [], []>} : vector<8x128xbf16>, vector<128x256xbf16>, vector<8x256xf32> -> vector<8x256xf32>
    %c0_45 = arith.constant 0 : index
    %c0_46 = arith.constant 0 : index
    %85 = vector.load %arg15[%c0_45, %c0_46] : memref<1x256xf32, #tpu.memory_space<vmem>>, vector<1x256xf32>
    %86 = vector.broadcast %85 : vector<1x256xf32> to vector<8x256xf32>
    %87 = arith.addf %84, %86 : vector<8x256xf32>
    %88 = arith.negf %87 : vector<8x256xf32>
    %89 = math.exp %88 : vector<8x256xf32>
    %cst_47 = arith.constant 1.000000e+00 : f32
    %90 = vector.broadcast %cst_47 : f32 to vector<8x256xf32>
    %91 = arith.addf %90, %89 : vector<8x256xf32>
    %92 = arith.divf %90, %91 : vector<8x256xf32>
    %c0_48 = arith.constant 0 : index
    %c0_49 = arith.constant 0 : index
    %93 = vector.load %arg16[%c0_48, %c0_49] : memref<8x256xf32, #tpu.memory_space<vmem>>, vector<8x256xf32>
    tpu.vector_store %arg16[%c0_48, %c0_49], %92 {strides = array<i32>} : memref<8x256xf32, #tpu.memory_space<vmem>>, vector<8x256xf32>,
    return
  }
  func.func @transform_0(%arg0: i32) -> (i32, i32) {
    %c0_i32 = arith.constant 0 : i32
    %c0_i32_0 = arith.constant 0 : i32
    return %arg0, %c0_i32 : i32, i32
  }
  func.func @transform_1(%arg0: i32) -> (i32, i32) {
    %c0_i32 = arith.constant 0 : i32
    %c0_i32_0 = arith.constant 0 : i32
    return %arg0, %c0_i32 : i32, i32
  }
  func.func @transform_2(%arg0: i32) -> (i32, i32) {
    %c0_i32 = arith.constant 0 : i32
    %c0_i32_0 = arith.constant 0 : i32
    %c0_i32_1 = arith.constant 0 : i32
    return %c0_i32, %c0_i32_0 : i32, i32
  }
  func.func @transform_3(%arg0: i32) -> (i32, i32) {
    %c0_i32 = arith.constant 0 : i32
    %c0_i32_0 = arith.constant 0 : i32
    %c0_i32_1 = arith.constant 0 : i32
    return %c0_i32, %c0_i32_0 : i32, i32
  }
  func.func @transform_4(%arg0: i32) -> (i32, i32) {
    %c0_i32 = arith.constant 0 : i32
    %c0_i32_0 = arith.constant 0 : i32
    %c0_i32_1 = arith.constant 0 : i32
    return %c0_i32, %c0_i32_0 : i32, i32
  }
  func.func @transform_5(%arg0: i32) -> (i32, i32) {
    %c0_i32 = arith.constant 0 : i32
    %c0_i32_0 = arith.constant 0 : i32
    %c0_i32_1 = arith.constant 0 : i32
    return %c0_i32, %c0_i32_0 : i32, i32
  }
  func.func @transform_6(%arg0: i32) -> (i32, i32) {
    %c0_i32 = arith.constant 0 : i32
    %c0_i32_0 = arith.constant 0 : i32
    %c0_i32_1 = arith.constant 0 : i32
    return %c0_i32, %c0_i32_0 : i32, i32
  }
  func.func @transform_7(%arg0: i32) -> (i32, i32) {
    %c0_i32 = arith.constant 0 : i32
    %c0_i32_0 = arith.constant 0 : i32
    %c0_i32_1 = arith.constant 0 : i32
    return %c0_i32, %c0_i32_0 : i32, i32
  }
  func.func @transform_8(%arg0: i32) -> (i32, i32) {
    %c0_i32 = arith.constant 0 : i32
    %c0_i32_0 = arith.constant 0 : i32
    %c0_i32_1 = arith.constant 0 : i32
    return %c0_i32, %c0_i32_0 : i32, i32
  }
  func.func @transform_9(%arg0: i32) -> (i32, i32) {
    %c0_i32 = arith.constant 0 : i32
    %c0_i32_0 = arith.constant 0 : i32
    %c0_i32_1 = arith.constant 0 : i32
    return %c0_i32, %c0_i32_0 : i32, i32
  }
  func.func @transform_10(%arg0: i32) -> (i32, i32) {
    %c0_i32 = arith.constant 0 : i32
    %c0_i32_0 = arith.constant 0 : i32
    %c0_i32_1 = arith.constant 0 : i32
    return %c0_i32, %c0_i32_0 : i32, i32
  }
  func.func @transform_11(%arg0: i32) -> (i32, i32) {
    %c0_i32 = arith.constant 0 : i32
    %c0_i32_0 = arith.constant 0 : i32
    %c0_i32_1 = arith.constant 0 : i32
    return %c0_i32, %c0_i32_0 : i32, i32
  }
  func.func @transform_12(%arg0: i32) -> (i32, i32) {
    %c0_i32 = arith.constant 0 : i32
    %c0_i32_0 = arith.constant 0 : i32
    %c0_i32_1 = arith.constant 0 : i32
    return %c0_i32, %c0_i32_0 : i32, i32
  }
  func.func @transform_13(%arg0: i32) -> (i32, i32) {
    %c0_i32 = arith.constant 0 : i32
    %c0_i32_0 = arith.constant 0 : i32
    %c0_i32_1 = arith.constant 0 : i32
    return %c0_i32, %c0_i32_0 : i32, i32
  }
  func.func @transform_14(%arg0: i32) -> (i32, i32) {
    %c0_i32 = arith.constant 0 : i32
    %c0_i32_0 = arith.constant 0 : i32
    %c0_i32_1 = arith.constant 0 : i32
    return %c0_i32, %c0_i32_0 : i32, i32
  }
  func.func @transform_15(%arg0: i32) -> (i32, i32) {
    %c0_i32 = arith.constant 0 : i32
    %c0_i32_0 = arith.constant 0 : i32
    return %arg0, %c0_i32 : i32, i32
  }
  func.func @transform_16(%arg0: i32) -> (i32, i32) {
    %c0_i32 = arith.constant 0 : i32
    %c0_i32_0 = arith.constant 0 : i32
    return %arg0, %c0_i32 : i32, i32
  }
  func.func @transform_17(%arg0: i32) -> (i32, i32) {
    %c0_i32 = arith.constant 0 : i32
    %c0_i32_0 = arith.constant 0 : i32
    return %arg0, %c0_i32 : i32, i32
  }
}

</mosaic_0001>

<llo_original>
// kernel: tpu_custom_call.1
$region0: #{tpu_custom_call.1}
  #allocation0 [shape = 'u32[]', space=smem, size = 0x4, offset = 0x4, fixed_abs, tag = 'smem constant byte address 0x4 - core index']
  #allocation1 [shape = 'u32[144,128]{1,0:T(1,128)}', space=vmem, size = 0x12000, scoped, tag = 'internal scratch']
  %s0 = inlined_call_operand.vmem [shape: bf16[8,256], index: 0, kind: input, shape index: {}]
  %s1 = inlined_call_operand.vmem [shape: f32[8,64], index: 1, kind: input, shape index: {}]
  %s2 = inlined_call_operand.hbm [shape: bf16[256,256], index: 2, kind: input, shape index: {}]
  %s3 = inlined_call_operand.hbm [shape: f32[1,256], index: 3, kind: input, shape index: {}]
  %s4 = inlined_call_operand.vmem [shape: bf16[128,128], index: 4, kind: input, shape index: {}]
  %s5 = inlined_call_operand.vmem [shape: f32[1,128], index: 5, kind: input, shape index: {}]
  %s6 = inlined_call_operand.vmem [shape: bf16[128,64], index: 6, kind: input, shape index: {}]
  %s7 = inlined_call_operand.hbm [shape: f32[1,64], index: 7, kind: input, shape index: {}]
  %s8 = inlined_call_operand.vmem [shape: bf16[128,64], index: 8, kind: input, shape index: {}]
  %s9 = inlined_call_operand.hbm [shape: f32[1,64], index: 9, kind: input, shape index: {}]
  %s10 = inlined_call_operand.vmem [shape: bf16[64,128], index: 10, kind: input, shape index: {}]
  %s11 = inlined_call_operand.hbm [shape: bf16[128,128], index: 11, kind: input, shape index: {}]
  %s12 = inlined_call_operand.hbm [shape: f32[1,128], index: 12, kind: input, shape index: {}]
  %s13 = inlined_call_operand.vmem [shape: bf16[128,256], index: 13, kind: input, shape index: {}]
  %s14 = inlined_call_operand.vmem [shape: f32[1,256], index: 14, kind: input, shape index: {}]
  %s15 = inlined_call_operand.hbm [shape: f32[8,256], index: 15, kind: output, shape index: {0}]
  %s16 = inlined_call_operand.hbm [shape: f32[8,128], index: 16, kind: output, shape index: {1}]
  %s17 = inlined_call_operand.hbm [shape: f32[8,128], index: 17, kind: output, shape index: {2}]
  %18 = xla_tuple %s15, %s16, %s17
  %s19 = sld [smem:[#allocation0]]
  $region110: #{tpu_custom_call.1} parent=0
    _
  %s21 = ssub.s32 1, %s19
  %s22 = scalar_select 0, %s21, %s19
  $region1: #{tpu_custom_call.1} parent=0
    #allocation2 [shape = 'u8[131072]{0}', space=vmem, size = 0x20000, scoped, tag = 'input window, operand 2, single buffered']
    #allocation3 [shape = 's32[1]{0}', space=sflag, size = 0x4, scoped, tag = 'scoped memory for tpu_custom_call.1']
    #allocation4 [shape = 's32[1]{0}', space=sflag, size = 0x4, scoped, tag = 'scoped memory for tpu_custom_call.1']
    #allocation5 [shape = 'u8[1024]{0}', space=vmem, size = 0x400, scoped, tag = 'input window, operand 3, single buffered']
    #allocation6 [shape = 's32[1]{0}', space=sflag, size = 0x4, scoped, tag = 'scoped memory for tpu_custom_call.1']
    #allocation7 [shape = 'u8[512]{0}', space=vmem, size = 0x400, scoped, tag = 'input window, operand 7, single buffered']
    #allocation8 [shape = 'u8[512]{0}', space=vmem, size = 0x400, scoped, tag = 'input window, operand 9, single buffered']
    #allocation9 [shape = 's32[1]{0}', space=sflag, size = 0x4, scoped, tag = 'scoped memory for tpu_custom_call.1']
    #allocation10 [shape = 'u8[32768]{0}', space=vmem, size = 0x8000, scoped, tag = 'input window, operand 11, single buffered']
    #allocation11 [shape = 'u8[512]{0}', space=vmem, size = 0x400, scoped, tag = 'input window, operand 12, single buffered']
    #allocation12 [shape = 's32[1]{0}', space=sflag, size = 0x4, scoped, tag = 'scoped memory for tpu_custom_call.1']
    #allocation13 [shape = 'u8[8192]{0}', space=vmem, size = 0x2000, scoped, tag = 'output window, operand 0, single buffered']
    #allocation14 [shape = 'u8[4096]{0}', space=vmem, size = 0x1000, scoped, tag = 'output window, operand 1, single buffered']
    #allocation15 [shape = 's32[1]{0}', space=sflag, size = 0x4, scoped, tag = 'scoped memory for tpu_custom_call.1']
    #allocation16 [shape = 'u8[4096]{0}', space=vmem, size = 0x1000, scoped, tag = 'output window, operand 2, single buffered']
    %23 = vsyncpa [#allocation3], 0
    %24 = vsyncpa [#allocation6], 0
    %25 = vsyncpa [#allocation9], 0
    %26 = vsyncpa [#allocation12], 0
    %27 = vsyncpa [#allocation4], 0
    %28 = vsyncpa [#allocation15], 0
    // Predicated region
    $region2: #{tpu_custom_call.1} parent=1 // pred_check
      _
    $region3: #{tpu_custom_call.1} parent=1 // pred_check_branch
      %30 = sbr.rel (0) target = $region5
    $region4: #{tpu_custom_call.1} parent=1 // pred_region
      _
    $region5: #{tpu_custom_call.1} parent=1 // pred_fallthru
      _
    // Predicated region
    $region6: #{tpu_custom_call.1} parent=1 // pred_check
      _
    $region7: #{tpu_custom_call.1} parent=1 // pred_check_branch
      %32 = sbr.rel (0) target = $region9
    $region8: #{tpu_custom_call.1} parent=1 // pred_region
      _
    $region9: #{tpu_custom_call.1} parent=1 // pred_fallthru
      _
    // Predicated region
    $region10: #{tpu_custom_call.1} parent=1 // pred_check
      _
    $region11: #{tpu_custom_call.1} parent=1 // pred_check_branch
      %34 = sbr.rel (0) target = $region13
    $region12: #{tpu_custom_call.1} parent=1 // pred_region
      %s36 = ssub.s32 4096, 4096
      %37 = vsyncadd [#allocation3], %s36
      %s38 = sshll.u32 [#allocation2], 4
      %s39 = int_to_ptr.vmem [resolvable:$true] %s38
      %44 = dma.hbm_to_vmem [thread:$0]  %s2, 4096, %s39, [#allocation3], 128, 128, 8
    $region13: #{tpu_custom_call.1} parent=1 // pred_fallthru
      _
    // Predicated region
    $region14: #{tpu_custom_call.1} parent=1 // pred_check
      _
    $region15: #{tpu_custom_call.1} parent=1 // pred_check_branch
      %46 = sbr.rel (0) target = $region17
    $region16: #{tpu_custom_call.1} parent=1 // pred_region
      %s48 = ssub.s32 32, 32
      %49 = vsyncadd [#allocation6], %s48
      %s51 = sshll.u32 [#allocation5], 4
      %s52 = int_to_ptr.vmem [resolvable:$true] %s51
      %54 = dma.hbm_to_vmem [thread:$0]  %s3, 32, %s52, [#allocation6]
    $region17: #{tpu_custom_call.1} parent=1 // pred_fallthru
      _
    // Predicated region
    $region18: #{tpu_custom_call.1} parent=1 // pred_check
      _
    $region19: #{tpu_custom_call.1} parent=1 // pred_check_branch
      %56 = sbr.rel (0) target = $region21
    $region20: #{tpu_custom_call.1} parent=1 // pred_region
      _
    $region21: #{tpu_custom_call.1} parent=1 // pred_fallthru
      _
    // Predicated region
    $region22: #{tpu_custom_call.1} parent=1 // pred_check
      _
    $region23: #{tpu_custom_call.1} parent=1 // pred_check_branch
      %58 = sbr.rel (0) target = $region25
    $region24: #{tpu_custom_call.1} parent=1 // pred_region
      _
    $region25: #{tpu_custom_call.1} parent=1 // pred_fallthru
      _
    // Predicated region
    $region26: #{tpu_custom_call.1} parent=1 // pred_check
      _
    $region27: #{tpu_custom_call.1} parent=1 // pred_check_branch
      %60 = sbr.rel (0) target = $region29
    $region28: #{tpu_custom_call.1} parent=1 // pred_region
      _
    $region29: #{tpu_custom_call.1} parent=1 // pred_fallthru
      _
    // Predicated region
    $region30: #{tpu_custom_call.1} parent=1 // pred_check
      _
    $region31: #{tpu_custom_call.1} parent=1 // pred_check_branch
      %62 = sbr.rel (0) target = $region33
    $region32: #{tpu_custom_call.1} parent=1 // pred_region
      %s64 = ssub.s32 16, 16
      %65 = vsyncadd [#allocation6], %s64
      %s67 = sshll.u32 [#allocation7], 4
      %s68 = int_to_ptr.vmem [resolvable:$true] %s67
      %70 = dma.hbm_to_vmem [thread:$0]  %s7, 16, %s68, [#allocation6]
    $region33: #{tpu_custom_call.1} parent=1 // pred_fallthru
      _
    // Predicated region
    $region34: #{tpu_custom_call.1} parent=1 // pred_check
      _
    $region35: #{tpu_custom_call.1} parent=1 // pred_check_branch
      %72 = sbr.rel (0) target = $region37
    $region36: #{tpu_custom_call.1} parent=1 // pred_region
      _
    $region37: #{tpu_custom_call.1} parent=1 // pred_fallthru
      _
    // Predicated region
    $region38: #{tpu_custom_call.1} parent=1 // pred_check
      _
    $region39: #{tpu_custom_call.1} parent=1 // pred_check_branch
      %74 = sbr.rel (0) target = $region41
    $region40: #{tpu_custom_call.1} parent=1 // pred_region
      %s76 = ssub.s32 16, 16
      %77 = vsyncadd [#allocation9], %s76
      %s79 = sshll.u32 [#allocation8], 4
      %s80 = int_to_ptr.vmem [resolvable:$true] %s79
      %82 = dma.hbm_to_vmem [thread:$0]  %s9, 16, %s80, [#allocation9]
    $region41: #{tpu_custom_call.1} parent=1 // pred_fallthru
      _
    // Predicated region
    $region42: #{tpu_custom_call.1} parent=1 // pred_check
      _
    $region43: #{tpu_custom_call.1} parent=1 // pred_check_branch
      %84 = sbr.rel (0) target = $region45
    $region44: #{tpu_custom_call.1} parent=1 // pred_region
      _
    $region45: #{tpu_custom_call.1} parent=1 // pred_fallthru
      _
    // Predicated region
    $region46: #{tpu_custom_call.1} parent=1 // pred_check
      _
    $region47: #{tpu_custom_call.1} parent=1 // pred_check_branch
      %86 = sbr.rel (0) target = $region49
    $region48: #{tpu_custom_call.1} parent=1 // pred_region
      %s88 = ssub.s32 1024, 1024
      %89 = vsyncadd [#allocation9], %s88
      %s90 = sshll.u32 [#allocation10], 4
      %s91 = int_to_ptr.vmem [resolvable:$true] %s90
      %96 = dma.hbm_to_vmem [thread:$0]  %s11, 1024, %s91, [#allocation9], 64, 64, 4
    $region49: #{tpu_custom_call.1} parent=1 // pred_fallthru
      _
    // Predicated region
    $region50: #{tpu_custom_call.1} parent=1 // pred_check
      _
    $region51: #{tpu_custom_call.1} parent=1 // pred_check_branch
      %98 = sbr.rel (0) target = $region53
    $region52: #{tpu_custom_call.1} parent=1 // pred_region
      %s100 = ssub.s32 16, 16
      %101 = vsyncadd [#allocation12], %s100
      %s103 = sshll.u32 [#allocation11], 4
      %s104 = int_to_ptr.vmem [resolvable:$true] %s103
      %106 = dma.hbm_to_vmem [thread:$0]  %s12, 16, %s104, [#allocation12]
    $region53: #{tpu_custom_call.1} parent=1 // pred_fallthru
      _
    // Predicated region
    $region54: #{tpu_custom_call.1} parent=1 // pred_check
      _
    $region55: #{tpu_custom_call.1} parent=1 // pred_check_branch
      %108 = sbr.rel (0) target = $region57
    $region56: #{tpu_custom_call.1} parent=1 // pred_region
      _
    $region57: #{tpu_custom_call.1} parent=1 // pred_fallthru
      _
    // Predicated region
    $region58: #{tpu_custom_call.1} parent=1 // pred_check
      _
    $region59: #{tpu_custom_call.1} parent=1 // pred_check_branch
      %110 = sbr.rel (0) target = $region61
    $region60: #{tpu_custom_call.1} parent=1 // pred_region
      _
    $region61: #{tpu_custom_call.1} parent=1 // pred_fallthru
      _
    // Predicated region
    $region62: #{tpu_custom_call.1} parent=1 // pred_check
      _
    $region63: #{tpu_custom_call.1} parent=1 // pred_check_branch
      %112 = sbr.rel (0) target = $region65
    $region64: #{tpu_custom_call.1} parent=1 // pred_region
      %113 = dma.done [#allocation3], 4096
    $region65: #{tpu_custom_call.1} parent=1 // pred_fallthru
      _
    // Predicated region
    $region66: #{tpu_custom_call.1} parent=1 // pred_check
      _
    $region67: #{tpu_custom_call.1} parent=1 // pred_check_branch
      %115 = sbr.rel (0) target = $region69
    $region68: #{tpu_custom_call.1} parent=1 // pred_region
      %116 = dma.done [#allocation6], 32
    $region69: #{tpu_custom_call.1} parent=1 // pred_fallthru
      _
    // Predicated region
    $region70: #{tpu_custom_call.1} parent=1 // pred_check
      _
    $region71: #{tpu_custom_call.1} parent=1 // pred_check_branch
      %118 = sbr.rel (0) target = $region73
    $region72: #{tpu_custom_call.1} parent=1 // pred_region
      %119 = dma.done [#allocation6], 16
    $region73: #{tpu_custom_call.1} parent=1 // pred_fallthru
      _
    // Predicated region
    $region74: #{tpu_custom_call.1} parent=1 // pred_check
      _
    $region75: #{tpu_custom_call.1} parent=1 // pred_check_branch
      %121 = sbr.rel (0) target = $region77
    $region76: #{tpu_custom_call.1} parent=1 // pred_region
      %122 = dma.done [#allocation9], 16
    $region77: #{tpu_custom_call.1} parent=1 // pred_fallthru
      _
    // Predicated region
    $region78: #{tpu_custom_call.1} parent=1 // pred_check
      _
    $region79: #{tpu_custom_call.1} parent=1 // pred_check_branch
      %124 = sbr.rel (0) target = $region81
    $region80: #{tpu_custom_call.1} parent=1 // pred_region
      %125 = dma.done [#allocation9], 1024
    $region81: #{tpu_custom_call.1} parent=1 // pred_fallthru
      _
    // Predicated region
    $region82: #{tpu_custom_call.1} parent=1 // pred_check
      _
    $region83: #{tpu_custom_call.1} parent=1 // pred_check_branch
      %127 = sbr.rel (0) target = $region85
    $region84: #{tpu_custom_call.1} parent=1 // pred_region
      %128 = dma.done [#allocation12], 16
    $region85: #{tpu_custom_call.1} parent=1 // pred_fallthru
      _
    %v130 = vld [vmem:[%s0] sm:$0xff]
    %v131 = vld [vmem:[#allocation2] sm:$0xff]
    %v132 = vld [vmem:[#allocation2 + $0x8] sm:$0xff]
    %v133 = vld [vmem:[#allocation2 + $0x10] sm:$0xff]
    %v134 = vld [vmem:[#allocation2 + $0x18] sm:$0xff]
    %v135 = vld [vmem:[#allocation2 + $0x20] sm:$0xff]
    %v136 = vld [vmem:[#allocation2 + $0x28] sm:$0xff]
    %v137 = vld [vmem:[#allocation2 + $0x30] sm:$0xff]
    %v138 = vld [vmem:[#allocation2 + $0x38] sm:$0xff]
    %v139 = vld [vmem:[#allocation2 + $0x40] sm:$0xff]
    %v140 = vld [vmem:[#allocation2 + $0x48] sm:$0xff]
    %v141 = vld [vmem:[#allocation2 + $0x50] sm:$0xff]
    %v142 = vld [vmem:[#allocation2 + $0x58] sm:$0xff]
    %v143 = vld [vmem:[#allocation2 + $0x60] sm:$0xff]
    %v144 = vld [vmem:[#allocation2 + $0x68] sm:$0xff]
    %v145 = vld [vmem:[#allocation2 + $0x70] sm:$0xff]
    %v146 = vld [vmem:[#allocation2 + $0x78] sm:$0xff]
    %v147 = vld [vmem:[#allocation2 + $0x80] sm:$0xff]
    %v148 = vld [vmem:[#allocation2 + $0x88] sm:$0xff]
    %v149 = vld [vmem:[#allocation2 + $0x90] sm:$0xff]
    %v150 = vld [vmem:[#allocation2 + $0x98] sm:$0xff]
    %v151 = vld [vmem:[#allocation2 + $0xa0] sm:$0xff]
    %v152 = vld [vmem:[#allocation2 + $0xa8] sm:$0xff]
    %v153 = vld [vmem:[#allocation2 + $0xb0] sm:$0xff]
    %v154 = vld [vmem:[#allocation2 + $0xb8] sm:$0xff]
    %v155 = vld [vmem:[#allocation2 + $0xc0] sm:$0xff]
    %v156 = vld [vmem:[#allocation2 + $0xc8] sm:$0xff]
    %v157 = vld [vmem:[#allocation2 + $0xd0] sm:$0xff]
    %v158 = vld [vmem:[#allocation2 + $0xd8] sm:$0xff]
    %v159 = vld [vmem:[#allocation2 + $0xe0] sm:$0xff]
    %v160 = vld [vmem:[#allocation2 + $0xe8] sm:$0xff]
    %v161 = vld [vmem:[#allocation2 + $0xf0] sm:$0xff]
    %v162 = vld [vmem:[#allocation2 + $0xf8] sm:$0xff]
    %v163 = vld [vmem:[#allocation5] sm:$0x3]
    %v165 = vlaneseq
    %v166 = vshrl.u32 %v165, 7
    %v167 = vsub.s32 0, %v166
    %v168 = vrot.slane %v163, %v167
    %v169 = vlaneseq
    %v170 = vshrl.u32 %v169, 7
    %v171 = vsub.s32 1, %v170
    %v172 = vrot.slane %v163, %v171
    %v176 = vunpack.c.l.b16 %v130
    %v177 = vunpack.c.h.b16 %v130
    %v178 = vpack.c.b16 %v176, %v176
    %v179 = vpack.c.b16 %v177, %v177
    %v214 = vunpack.c.l.b16 %v131
    %v215 = vunpack.c.h.b16 %v131
    %v216 = vunpack.c.l.b16 %v132
    %v217 = vunpack.c.h.b16 %v132
    %v218 = vunpack.c.l.b16 %v133
    %v219 = vunpack.c.h.b16 %v133
    %v220 = vunpack.c.l.b16 %v134
    %v221 = vunpack.c.h.b16 %v134
    %v222 = vunpack.c.l.b16 %v135
    %v223 = vunpack.c.h.b16 %v135
    %v224 = vunpack.c.l.b16 %v136
    %v225 = vunpack.c.h.b16 %v136
    %v226 = vunpack.c.l.b16 %v137
    %v227 = vunpack.c.h.b16 %v137
    %v228 = vunpack.c.l.b16 %v138
    %v229 = vunpack.c.h.b16 %v138
    %v230 = vunpack.c.l.b16 %v139
    %v231 = vunpack.c.h.b16 %v139
    %v232 = vunpack.c.l.b16 %v140
    %v233 = vunpack.c.h.b16 %v140
    %v234 = vunpack.c.l.b16 %v141
    %v235 = vunpack.c.h.b16 %v141
    %v236 = vunpack.c.l.b16 %v142
    %v237 = vunpack.c.h.b16 %v142
    %v238 = vunpack.c.l.b16 %v143
    %v239 = vunpack.c.h.b16 %v143
    %v240 = vunpack.c.l.b16 %v144
    %v241 = vunpack.c.h.b16 %v144
    %v242 = vunpack.c.l.b16 %v145
    %v243 = vunpack.c.h.b16 %v145
    %v244 = vunpack.c.l.b16 %v146
    %v245 = vunpack.c.h.b16 %v146
    %v246 = vunpack.c.l.b16 %v147
    %v247 = vunpack.c.h.b16 %v147
    %v248 = vunpack.c.l.b16 %v148
    %v249 = vunpack.c.h.b16 %v148
    %v250 = vunpack.c.l.b16 %v149
    %v251 = vunpack.c.h.b16 %v149
    %v252 = vunpack.c.l.b16 %v150
    %v253 = vunpack.c.h.b16 %v150
    %v254 = vunpack.c.l.b16 %v151
    %v255 = vunpack.c.h.b16 %v151
    %v256 = vunpack.c.l.b16 %v152
    %v257 = vunpack.c.h.b16 %v152
    %v258 = vunpack.c.l.b16 %v153
    %v259 = vunpack.c.h.b16 %v153
    %v260 = vunpack.c.l.b16 %v154
    %v261 = vunpack.c.h.b16 %v154
    %v262 = vunpack.c.l.b16 %v155
    %v263 = vunpack.c.h.b16 %v155
    %v264 = vunpack.c.l.b16 %v156
    %v265 = vunpack.c.h.b16 %v156
    %v266 = vunpack.c.l.b16 %v157
    %v267 = vunpack.c.h.b16 %v157
    %v268 = vunpack.c.l.b16 %v158
    %v269 = vunpack.c.h.b16 %v158
    %v270 = vunpack.c.l.b16 %v159
    %v271 = vunpack.c.h.b16 %v159
    %v272 = vunpack.c.l.b16 %v160
    %v273 = vunpack.c.h.b16 %v160
    %v274 = vunpack.c.l.b16 %v161
    %v275 = vunpack.c.h.b16 %v161
    %v276 = vunpack.c.l.b16 %v162
    %v277 = vunpack.c.h.b16 %v162
    %v278 = vpack.c.b16 %v216, %v214
    %v279 = vpack.c.b16 %v217, %v215
    %v280 = vpack.c.b16 %v220, %v218
    %v281 = vpack.c.b16 %v221, %v219
    %v282 = vpack.c.b16 %v224, %v222
    %v283 = vpack.c.b16 %v225, %v223
    %v284 = vpack.c.b16 %v228, %v226
    %v285 = vpack.c.b16 %v229, %v227
    %v286 = vpack.c.b16 %v232, %v230
    %v287 = vpack.c.b16 %v233, %v231
    %v288 = vpack.c.b16 %v236, %v234
    %v289 = vpack.c.b16 %v237, %v235
    %v290 = vpack.c.b16 %v240, %v238
    %v291 = vpack.c.b16 %v241, %v239
    %v292 = vpack.c.b16 %v244, %v242
    %v293 = vpack.c.b16 %v245, %v243
    %v294 = vpack.c.b16 %v248, %v246
    %v295 = vpack.c.b16 %v249, %v247
    %v296 = vpack.c.b16 %v252, %v250
    %v297 = vpack.c.b16 %v253, %v251
    %v298 = vpack.c.b16 %v256, %v254
    %v299 = vpack.c.b16 %v257, %v255
    %v300 = vpack.c.b16 %v260, %v258
    %v301 = vpack.c.b16 %v261, %v259
    %v302 = vpack.c.b16 %v264, %v262
    %v303 = vpack.c.b16 %v265, %v263
    %v304 = vpack.c.b16 %v268, %v266
    %v305 = vpack.c.b16 %v269, %v267
    %v306 = vpack.c.b16 %v272, %v270
    %v307 = vpack.c.b16 %v273, %v271
    %v308 = vpack.c.b16 %v276, %v274
    %v309 = vpack.c.b16 %v277, %v275
    %342 = vmatprep.subr.bf16.mxu0 %v279
    %343 = vmatpush1.bf16.msra.mxu0 %v278
    %344 = vmatprep.subr.bf16.mxu0 %v281
    %345 = vmatpush1.bf16.msra.mxu0 %v280
    %346 = vmatprep.subr.bf16.mxu0 %v283
    %347 = vmatpush1.bf16.msra.mxu0 %v282
    %348 = vmatprep.subr.bf16.mxu0 %v285
    %349 = vmatpush1.bf16.msra.mxu0 %v284
    %350 = vmatprep.subr.bf16.mxu0 %v287
    %351 = vmatpush1.bf16.msra.mxu0 %v286
    %352 = vmatprep.subr.bf16.mxu0 %v289
    %353 = vmatpush1.bf16.msra.mxu0 %v288
    %354 = vmatprep.subr.bf16.mxu0 %v291
    %355 = vmatpush1.bf16.msra.mxu0 %v290
    %356 = vmatprep.subr.bf16.mxu0 %v293
    %357 = vmatpush1.bf16.msra.mxu0 %v292
    %358 = vmatprep.subr.bf16.mxu0 %v295
    %359 = vmatpush1.bf16.msra.mxu0 %v294
    %360 = vmatprep.subr.bf16.mxu0 %v297
    %361 = vmatpush1.bf16.msra.mxu0 %v296
    %362 = vmatprep.subr.bf16.mxu0 %v299
    %363 = vmatpush1.bf16.msra.mxu0 %v298
    %364 = vmatprep.subr.bf16.mxu0 %v301
    %365 = vmatpush1.bf16.msra.mxu0 %v300
    %366 = vmatprep.subr.bf16.mxu0 %v303
    %367 = vmatpush1.bf16.msra.mxu0 %v302
    %368 = vmatprep.subr.bf16.mxu0 %v305
    %369 = vmatpush1.bf16.msra.mxu0 %v304
    %370 = vmatprep.subr.bf16.mxu0 %v307
    %371 = vmatpush1.bf16.msra.mxu0 %v306
    %372 = vmatprep.subr.bf16.mxu0 %v309
    %373 = vmatpush1.bf16.msra.mxu0 %v308
    %374 = vmatprep.mubr.bf16.mxu0 %v179
    %375 = vmatmul.mubr.bf16.gmra.mrb[0].mxu0 %v178
    %v376 = vpop.f32.mrb[0].mxu0
    %v377 = vadd.f32 %v168, %v376
    %v378 = vpop.f32.mrb[0].mxu0
    %v379 = vadd.f32 %v172, %v378
    %v380 = vpop.f32.mrb[0].mxu0
    %v381 = vpop.f32.mrb[0].mxu0
    %382 = vdwg.mxu0
    %v383 = vmax.f32 %v377, 0.0
    %v384 = vmax.f32 %v379, 0.0
    %vm385 = vcmp.ne.f32.partialorder %v377, %v377
    %vm386 = vcmp.ne.f32.partialorder %v379, %v379
    %v387 = vadd.f32 %v377, 0.0
    %v388 = vadd.f32 %v379, 0.0
    %v389 = vand.u32 2147483647, %v377
    %v390 = vand.u32 2147483647, %v379
    %v391 = vsub.f32 0.0, %v389
    %v392 = vsub.f32 0.0, %v390
    %v393 = vmul.f32 %v391, 1.442695
    %v394 = vpow.pop %v393
    %v395 = vmul.f32 %v392, 1.442695
    %v396 = vpow.pop %v395
    %v397 = vadd.f32 %v394, 1.0
    %v398 = vlog2.pop %v397
    %v399 = vmul.f32 %v398, 0.6931472
    %v400 = vmul.f32 -0.5, %v394
    %v401 = vadd.f32 %v400, 1.0
    %v402 = vmul.f32 %v401, %v394
    %v403 = vand.u32 2147483647, %v394
    %vm404 = vcmp.lt.f32.partialorder %v403, 0.0004427343
    %v405 = vsel %vm404, %v402, %v399
    %v406 = vadd.f32 %v396, 1.0
    %v407 = vlog2.pop %v406
    %v408 = vmul.f32 %v407, 0.6931472
    %v409 = vmul.f32 -0.5, %v396
    %v410 = vadd.f32 %v409, 1.0
    %v411 = vmul.f32 %v410, %v396
    %v412 = vand.u32 2147483647, %v396
    %vm413 = vcmp.lt.f32.partialorder %v412, 0.0004427343
    %v414 = vsel %vm413, %v411, %v408
    %v415 = vadd.f32 %v383, %v405
    %v416 = vadd.f32 %v384, %v414
    %v417 = vsel %vm385, %v387, %v415
    %v418 = vsel %vm386, %v388, %v416
    %v419 = vpack.c.bf16 %v417, %v417
    %v420 = vld [vmem:[%s4] sm:$0xf]
    %v421 = vld [vmem:[%s4 + $0x4] sm:$0xf]
    %v422 = vld [vmem:[%s4 + $0x8] sm:$0xf]
    %v423 = vld [vmem:[%s4 + $0xc] sm:$0xf]
    %v424 = vld [vmem:[%s4 + $0x10] sm:$0xf]
    %v425 = vld [vmem:[%s4 + $0x14] sm:$0xf]
    %v426 = vld [vmem:[%s4 + $0x18] sm:$0xf]
    %v427 = vld [vmem:[%s4 + $0x1c] sm:$0xf]
    %v428 = vld [vmem:[%s4 + $0x20] sm:$0xf]
    %v429 = vld [vmem:[%s4 + $0x24] sm:$0xf]
    %v430 = vld [vmem:[%s4 + $0x28] sm:$0xf]
    %v431 = vld [vmem:[%s4 + $0x2c] sm:$0xf]
    %v432 = vld [vmem:[%s4 + $0x30] sm:$0xf]
    %v433 = vld [vmem:[%s4 + $0x34] sm:$0xf]
    %v434 = vld [vmem:[%s4 + $0x38] sm:$0xf]
    %v435 = vld [vmem:[%s4 + $0x3c] sm:$0xf]
    %v436 = vld [vmem:[%s5] sm:$0x1]
    %v438 = vlaneseq
    %v439 = vshrl.u32 %v438, 7
    %v440 = vsub.s32 0, %v439
    %v441 = vrot.slane %v436, %v440
    %v459 = vunpack.c.l.b16 %v420
    %v460 = vunpack.c.l.b16 %v421
    %v461 = vunpack.c.l.b16 %v422
    %v462 = vunpack.c.l.b16 %v423
    %v463 = vunpack.c.l.b16 %v424
    %v464 = vunpack.c.l.b16 %v425
    %v465 = vunpack.c.l.b16 %v426
    %v466 = vunpack.c.l.b16 %v427
    %v467 = vunpack.c.l.b16 %v428
    %v468 = vunpack.c.l.b16 %v429
    %v469 = vunpack.c.l.b16 %v430
    %v470 = vunpack.c.l.b16 %v431
    %v471 = vunpack.c.l.b16 %v432
    %v472 = vunpack.c.l.b16 %v433
    %v473 = vunpack.c.l.b16 %v434
    %v474 = vunpack.c.l.b16 %v435
    %v475 = vpack.c.b16 %v460, %v459
    %v476 = vpack.c.b16 %v462, %v461
    %v477 = vpack.c.b16 %v464, %v463
    %v478 = vpack.c.b16 %v466, %v465
    %v479 = vpack.c.b16 %v468, %v467
    %v480 = vpack.c.b16 %v470, %v469
    %v481 = vpack.c.b16 %v472, %v471
    %v482 = vpack.c.b16 %v474, %v473
    %491 = vmatprep.subr.bf16.mxu0 0
    %492 = vmatpush1.bf16.msra.mxu0 %v475
    %493 = vmatprep.subr.bf16.mxu0 0
    %494 = vmatpush1.bf16.msra.mxu0 %v476
    %495 = vmatprep.subr.bf16.mxu0 0
    %496 = vmatpush1.bf16.msra.mxu0 %v477
    %497 = vmatprep.subr.bf16.mxu0 0
    %498 = vmatpush1.bf16.msra.mxu0 %v478
    %499 = vmatprep.subr.bf16.mxu0 0
    %500 = vmatpush1.bf16.msra.mxu0 %v479
    %501 = vmatprep.subr.bf16.mxu0 0
    %502 = vmatpush1.bf16.msra.mxu0 %v480
    %503 = vmatprep.subr.bf16.mxu0 0
    %504 = vmatpush1.bf16.msra.mxu0 %v481
    %505 = vmatprep.subr.bf16.mxu0 0
    %506 = vmatpush1.bf16.msra.mxu0 %v482
    %507 = vmatprep.subr.bf16.mxu0 0
    %508 = vmatpush1.bf16.msra.mxu0 0
    %509 = vmatprep.subr.bf16.mxu0 0
    %510 = vmatpush1.bf16.msra.mxu0 0
    %511 = vmatprep.subr.bf16.mxu0 0
    %512 = vmatpush1.bf16.msra.mxu0 0
    %513 = vmatprep.subr.bf16.mxu0 0
    %514 = vmatpush1.bf16.msra.mxu0 0
    %515 = vmatprep.subr.bf16.mxu0 0
    %516 = vmatpush1.bf16.msra.mxu0 0
    %517 = vmatprep.subr.bf16.mxu0 0
    %518 = vmatpush1.bf16.msra.mxu0 0
    %519 = vmatprep.subr.bf16.mxu0 0
    %520 = vmatpush1.bf16.msra.mxu0 0
    %521 = vmatprep.subr.bf16.mxu0 0
    %522 = vmatpush1.bf16.msra.mxu0 0
    %523 = vmatprep.mubr.bf16.mxu0 0
    %524 = vmatmul.mubr.bf16.gmra.mrb[0].mxu0 %v419
    %v525 = vpop.f32.mrb[0].mxu0
    %v526 = vadd.f32 %v441, %v525
    %v527 = vpop.f32.mrb[0].mxu0
    %v528 = vpop.f32.mrb[0].mxu0
    %v529 = vpop.f32.mrb[0].mxu0
    %530 = vdwg.mxu0
    %531 = vmax.xlane.f32.xlu0 %v526
    %v532 = vpop.xlane.xlu0 %531
    %v533 = vsub.f32 %v526, %v532
    %v534 = vmul.f32 %v533, 1.442695
    %v535 = vpow.pop %v534
    %536 = vadd.xlane.f32.xlu0 %v535
    %v537 = vpop.xlane.xlu0 %536
    %v538 = vrcp.pop %v537
    %v539 = vmul.f32 %v535, %v538
    %540 = vst [vmem:[#allocation16] sm:$0xff] %v539
    %v541 = vpack.c.bf16 %v418, %v418
    %v542 = vld [vmem:[%s6] sm:$0xf]
    %v543 = vld [vmem:[%s6 + $0x4] sm:$0xf]
    %v544 = vld [vmem:[%s6 + $0x8] sm:$0xf]
    %v545 = vld [vmem:[%s6 + $0xc] sm:$0xf]
    %v546 = vld [vmem:[%s6 + $0x10] sm:$0xf]
    %v547 = vld [vmem:[%s6 + $0x14] sm:$0xf]
    %v548 = vld [vmem:[%s6 + $0x18] sm:$0xf]
    %v549 = vld [vmem:[%s6 + $0x1c] sm:$0xf]
    %v550 = vld [vmem:[%s6 + $0x20] sm:$0xf]
    %v551 = vld [vmem:[%s6 + $0x24] sm:$0xf]
    %v552 = vld [vmem:[%s6 + $0x28] sm:$0xf]
    %v553 = vld [vmem:[%s6 + $0x2c] sm:$0xf]
    %v554 = vld [vmem:[%s6 + $0x30] sm:$0xf]
    %v555 = vld [vmem:[%s6 + $0x34] sm:$0xf]
    %v556 = vld [vmem:[%s6 + $0x38] sm:$0xf]
    %v557 = vld [vmem:[%s6 + $0x3c] sm:$0xf]
    %v558 = vld [vmem:[#allocation7] sm:$0x1]
    %v560 = vlaneseq
    %v561 = vshrl.u32 %v560, 7
    %v562 = vsub.s32 0, %v561
    %v563 = vrot.slane %v558, %v562
    %v581 = vunpack.c.l.b16 %v542
    %v582 = vunpack.c.l.b16 %v543
    %v583 = vunpack.c.l.b16 %v544
    %v584 = vunpack.c.l.b16 %v545
    %v585 = vunpack.c.l.b16 %v546
    %v586 = vunpack.c.l.b16 %v547
    %v587 = vunpack.c.l.b16 %v548
    %v588 = vunpack.c.l.b16 %v549
    %v589 = vunpack.c.l.b16 %v550
    %v590 = vunpack.c.l.b16 %v551
    %v591 = vunpack.c.l.b16 %v552
    %v592 = vunpack.c.l.b16 %v553
    %v593 = vunpack.c.l.b16 %v554
    %v594 = vunpack.c.l.b16 %v555
    %v595 = vunpack.c.l.b16 %v556
    %v596 = vunpack.c.l.b16 %v557
    %v597 = vpack.c.b16 %v582, %v581
    %v598 = vpack.c.b16 %v584, %v583
    %v599 = vpack.c.b16 %v586, %v585
    %v600 = vpack.c.b16 %v588, %v587
    %v601 = vpack.c.b16 %v590, %v589
    %v602 = vpack.c.b16 %v592, %v591
    %v603 = vpack.c.b16 %v594, %v593
    %v604 = vpack.c.b16 %v596, %v595
    %613 = vmatprep.subr.bf16.mxu0 0
    %614 = vmatpush1.bf16.msra.mxu0 %v597
    %615 = vmatprep.subr.bf16.mxu0 0
    %616 = vmatpush1.bf16.msra.mxu0 %v598
    %617 = vmatprep.subr.bf16.mxu0 0
    %618 = vmatpush1.bf16.msra.mxu0 %v599
    %619 = vmatprep.subr.bf16.mxu0 0
    %620 = vmatpush1.bf16.msra.mxu0 %v600
    %621 = vmatprep.subr.bf16.mxu0 0
    %622 = vmatpush1.bf16.msra.mxu0 %v601
    %623 = vmatprep.subr.bf16.mxu0 0
    %624 = vmatpush1.bf16.msra.mxu0 %v602
    %625 = vmatprep.subr.bf16.mxu0 0
    %626 = vmatpush1.bf16.msra.mxu0 %v603
    %627 = vmatprep.subr.bf16.mxu0 0
    %628 = vmatpush1.bf16.msra.mxu0 %v604
    %629 = vmatprep.subr.bf16.mxu0 0
    %630 = vmatpush1.bf16.msra.mxu0 0
    %631 = vmatprep.subr.bf16.mxu0 0
    %632 = vmatpush1.bf16.msra.mxu0 0
    %633 = vmatprep.subr.bf16.mxu0 0
    %634 = vmatpush1.bf16.msra.mxu0 0
    %635 = vmatprep.subr.bf16.mxu0 0
    %636 = vmatpush1.bf16.msra.mxu0 0
    %637 = vmatprep.subr.bf16.mxu0 0
    %638 = vmatpush1.bf16.msra.mxu0 0
    %639 = vmatprep.subr.bf16.mxu0 0
    %640 = vmatpush1.bf16.msra.mxu0 0
    %641 = vmatprep.subr.bf16.mxu0 0
    %642 = vmatpush1.bf16.msra.mxu0 0
    %643 = vmatprep.subr.bf16.mxu0 0
    %644 = vmatpush1.bf16.msra.mxu0 0
    %645 = vmatprep.mubr.bf16.mxu0 0
    %646 = vmatmul.mubr.bf16.gmra.mrb[0].mxu0 %v541
    %v647 = vpop.f32.mrb[0].mxu0
    %v648 = vadd.f32 %v563, %v647
    %v649 = vpop.f32.mrb[0].mxu0
    %v650 = vpop.f32.mrb[0].mxu0
    %v651 = vpop.f32.mrb[0].mxu0
    %652 = vdwg.mxu0
    %v653 = vld [vmem:[%s8] sm:$0xf]
    %v654 = vld [vmem:[%s8 + $0x4] sm:$0xf]
    %v655 = vld [vmem:[%s8 + $0x8] sm:$0xf]
    %v656 = vld [vmem:[%s8 + $0xc] sm:$0xf]
    %v657 = vld [vmem:[%s8 + $0x10] sm:$0xf]
    %v658 = vld [vmem:[%s8 + $0x14] sm:$0xf]
    %v659 = vld [vmem:[%s8 + $0x18] sm:$0xf]
    %v660 = vld [vmem:[%s8 + $0x1c] sm:$0xf]
    %v661 = vld [vmem:[%s8 + $0x20] sm:$0xf]
    %v662 = vld [vmem:[%s8 + $0x24] sm:$0xf]
    %v663 = vld [vmem:[%s8 + $0x28] sm:$0xf]
    %v664 = vld [vmem:[%s8 + $0x2c] sm:$0xf]
    %v665 = vld [vmem:[%s8 + $0x30] sm:$0xf]
    %v666 = vld [vmem:[%s8 + $0x34] sm:$0xf]
    %v667 = vld [vmem:[%s8 + $0x38] sm:$0xf]
    %v668 = vld [vmem:[%s8 + $0x3c] sm:$0xf]
    %v669 = vld [vmem:[#allocation8] sm:$0x1]
    %v671 = vlaneseq
    %v672 = vshrl.u32 %v671, 7
    %v673 = vsub.s32 0, %v672
    %v674 = vrot.slane %v669, %v673
    %v692 = vunpack.c.l.b16 %v653
    %v693 = vunpack.c.l.b16 %v654
    %v694 = vunpack.c.l.b16 %v655
    %v695 = vunpack.c.l.b16 %v656
    %v696 = vunpack.c.l.b16 %v657
    %v697 = vunpack.c.l.b16 %v658
    %v698 = vunpack.c.l.b16 %v659
    %v699 = vunpack.c.l.b16 %v660
    %v700 = vunpack.c.l.b16 %v661
    %v701 = vunpack.c.l.b16 %v662
    %v702 = vunpack.c.l.b16 %v663
    %v703 = vunpack.c.l.b16 %v664
    %v704 = vunpack.c.l.b16 %v665
    %v705 = vunpack.c.l.b16 %v666
    %v706 = vunpack.c.l.b16 %v667
    %v707 = vunpack.c.l.b16 %v668
    %v708 = vpack.c.b16 %v693, %v692
    %v709 = vpack.c.b16 %v695, %v694
    %v710 = vpack.c.b16 %v697, %v696
    %v711 = vpack.c.b16 %v699, %v698
    %v712 = vpack.c.b16 %v701, %v700
    %v713 = vpack.c.b16 %v703, %v702
    %v714 = vpack.c.b16 %v705, %v704
    %v715 = vpack.c.b16 %v707, %v706
    %724 = vmatprep.subr.bf16.mxu0 0
    %725 = vmatpush1.bf16.msra.mxu0 %v708
    %726 = vmatprep.subr.bf16.mxu0 0
    %727 = vmatpush1.bf16.msra.mxu0 %v709
    %728 = vmatprep.subr.bf16.mxu0 0
    %729 = vmatpush1.bf16.msra.mxu0 %v710
    %730 = vmatprep.subr.bf16.mxu0 0
    %731 = vmatpush1.bf16.msra.mxu0 %v711
    %732 = vmatprep.subr.bf16.mxu0 0
    %733 = vmatpush1.bf16.msra.mxu0 %v712
    %734 = vmatprep.subr.bf16.mxu0 0
    %735 = vmatpush1.bf16.msra.mxu0 %v713
    %736 = vmatprep.subr.bf16.mxu0 0
    %737 = vmatpush1.bf16.msra.mxu0 %v714
    %738 = vmatprep.subr.bf16.mxu0 0
    %739 = vmatpush1.bf16.msra.mxu0 %v715
    %740 = vmatprep.subr.bf16.mxu0 0
    %741 = vmatpush1.bf16.msra.mxu0 0
    %742 = vmatprep.subr.bf16.mxu0 0
    %743 = vmatpush1.bf16.msra.mxu0 0
    %744 = vmatprep.subr.bf16.mxu0 0
    %745 = vmatpush1.bf16.msra.mxu0 0
    %746 = vmatprep.subr.bf16.mxu0 0
    %747 = vmatpush1.bf16.msra.mxu0 0
    %748 = vmatprep.subr.bf16.mxu0 0
    %749 = vmatpush1.bf16.msra.mxu0 0
    %750 = vmatprep.subr.bf16.mxu0 0
    %751 = vmatpush1.bf16.msra.mxu0 0
    %752 = vmatprep.subr.bf16.mxu0 0
    %753 = vmatpush1.bf16.msra.mxu0 0
    %754 = vmatprep.subr.bf16.mxu0 0
    %755 = vmatpush1.bf16.msra.mxu0 0
    %756 = vmatprep.mubr.bf16.mxu0 0
    %757 = vmatmul.mubr.bf16.gmra.mrb[0].mxu0 %v541
    %v758 = vpop.f32.mrb[0].mxu0
    %v759 = vadd.f32 %v674, %v758
    %v760 = vpop.f32.mrb[0].mxu0
    %v761 = vpop.f32.mrb[0].mxu0
    %v762 = vpop.f32.mrb[0].mxu0
    %763 = vdwg.mxu0
    %vm764 = vcmask 523264
    %765 = vst.msk [vmem:[#allocation14] sm:$0xff] %vm764, %v648
    %767 = vrot.lane.b32.xlu0 %v759, 64
    %v768 = vpop.permute.xlu0 %767
    %vm770 = vcmask 1048064
    %771 = vst.msk [vmem:[#allocation14] sm:$0xff] %vm770, %v768
    %v772 = vld [vmem:[%s1] sm:$0xff]
    %v773 = vmul.f32 %v759, 0.5
    %v774 = vmul.f32 %v773, 1.442695
    %v775 = vpow.pop %v774
    %v776 = vmul.f32 %v772, %v775
    %v777 = vadd.f32 %v648, %v776
    %v778 = vpack.c.bf16 %v777, %v777
    %v779 = vld [vmem:[%s10] sm:$0xf]
    %v780 = vld [vmem:[%s10 + $0x4] sm:$0xf]
    %v781 = vld [vmem:[%s10 + $0x8] sm:$0xf]
    %v782 = vld [vmem:[%s10 + $0xc] sm:$0xf]
    %v783 = vld [vmem:[%s10 + $0x10] sm:$0xf]
    %v784 = vld [vmem:[%s10 + $0x14] sm:$0xf]
    %v785 = vld [vmem:[%s10 + $0x18] sm:$0xf]
    %v786 = vld [vmem:[%s10 + $0x1c] sm:$0xf]
    %v787 = vpack.c.bf16 %v539, %v539
    %v788 = vld [vmem:[#allocation10] sm:$0xf]
    %v789 = vld [vmem:[#allocation10 + $0x4] sm:$0xf]
    %v790 = vld [vmem:[#allocation10 + $0x8] sm:$0xf]
    %v791 = vld [vmem:[#allocation10 + $0xc] sm:$0xf]
    %v792 = vld [vmem:[#allocation10 + $0x10] sm:$0xf]
    %v793 = vld [vmem:[#allocation10 + $0x14] sm:$0xf]
    %v794 = vld [vmem:[#allocation10 + $0x18] sm:$0xf]
    %v795 = vld [vmem:[#allocation10 + $0x1c] sm:$0xf]
    %v796 = vld [vmem:[#allocation10 + $0x20] sm:$0xf]
    %v797 = vld [vmem:[#allocation10 + $0x24] sm:$0xf]
    %v798 = vld [vmem:[#allocation10 + $0x28] sm:$0xf]
    %v799 = vld [vmem:[#allocation10 + $0x2c] sm:$0xf]
    %v800 = vld [vmem:[#allocation10 + $0x30] sm:$0xf]
    %v801 = vld [vmem:[#allocation10 + $0x34] sm:$0xf]
    %v802 = vld [vmem:[#allocation10 + $0x38] sm:$0xf]
    %v803 = vld [vmem:[#allocation10 + $0x3c] sm:$0xf]
    %v820 = vunpack.c.l.b16 %v788
    %v821 = vunpack.c.l.b16 %v789
    %v822 = vunpack.c.l.b16 %v790
    %v823 = vunpack.c.l.b16 %v791
    %v824 = vunpack.c.l.b16 %v792
    %v825 = vunpack.c.l.b16 %v793
    %v826 = vunpack.c.l.b16 %v794
    %v827 = vunpack.c.l.b16 %v795
    %v828 = vunpack.c.l.b16 %v796
    %v829 = vunpack.c.l.b16 %v797
    %v830 = vunpack.c.l.b16 %v798
    %v831 = vunpack.c.l.b16 %v799
    %v832 = vunpack.c.l.b16 %v800
    %v833 = vunpack.c.l.b16 %v801
    %v834 = vunpack.c.l.b16 %v802
    %v835 = vunpack.c.l.b16 %v803
    %v836 = vpack.c.b16 %v821, %v820
    %v837 = vpack.c.b16 %v823, %v822
    %v838 = vpack.c.b16 %v825, %v824
    %v839 = vpack.c.b16 %v827, %v826
    %v840 = vpack.c.b16 %v829, %v828
    %v841 = vpack.c.b16 %v831, %v830
    %v842 = vpack.c.b16 %v833, %v832
    %v843 = vpack.c.b16 %v835, %v834
    %852 = vmatprep.subr.bf16.mxu0 0
    %853 = vmatpush1.bf16.msra.mxu0 %v836
    %854 = vmatprep.subr.bf16.mxu0 0
    %855 = vmatpush1.bf16.msra.mxu0 %v837
    %856 = vmatprep.subr.bf16.mxu0 0
    %857 = vmatpush1.bf16.msra.mxu0 %v838
    %858 = vmatprep.subr.bf16.mxu0 0
    %859 = vmatpush1.bf16.msra.mxu0 %v839
    %860 = vmatprep.subr.bf16.mxu0 0
    %861 = vmatpush1.bf16.msra.mxu0 %v840
    %862 = vmatprep.subr.bf16.mxu0 0
    %863 = vmatpush1.bf16.msra.mxu0 %v841
    %864 = vmatprep.subr.bf16.mxu0 0
    %865 = vmatpush1.bf16.msra.mxu0 %v842
    %866 = vmatprep.subr.bf16.mxu0 0
    %867 = vmatpush1.bf16.msra.mxu0 %v843
    %868 = vmatprep.subr.bf16.mxu0 0
    %869 = vmatpush1.bf16.msra.mxu0 0
    %870 = vmatprep.subr.bf16.mxu0 0
    %871 = vmatpush1.bf16.msra.mxu0 0
    %872 = vmatprep.subr.bf16.mxu0 0
    %873 = vmatpush1.bf16.msra.mxu0 0
    %874 = vmatprep.subr.bf16.mxu0 0
    %875 = vmatpush1.bf16.msra.mxu0 0
    %876 = vmatprep.subr.bf16.mxu0 0
    %877 = vmatpush1.bf16.msra.mxu0 0
    %878 = vmatprep.subr.bf16.mxu0 0
    %879 = vmatpush1.bf16.msra.mxu0 0
    %880 = vmatprep.subr.bf16.mxu0 0
    %881 = vmatpush1.bf16.msra.mxu0 0
    %882 = vmatprep.subr.bf16.mxu0 0
    %883 = vmatpush1.bf16.msra.mxu0 0
    %884 = vmatprep.mubr.bf16.mxu0 0
    %885 = vmatmul.mubr.bf16.gmra.mrb[0].mxu0 %v787
    %v886 = vpop.f32.mrb[0].mxu0
    %v887 = vadd.f32 0.0, %v886
    %v888 = vpop.f32.mrb[0].mxu0
    %v889 = vpop.f32.mrb[0].mxu0
    %v890 = vpop.f32.mrb[0].mxu0
    %891 = vdwg.mxu0
    %v900 = vunpack.c.l.b16 %v779
    %v901 = vunpack.c.l.b16 %v780
    %v902 = vunpack.c.l.b16 %v781
    %v903 = vunpack.c.l.b16 %v782
    %v904 = vunpack.c.l.b16 %v783
    %v905 = vunpack.c.l.b16 %v784
    %v906 = vunpack.c.l.b16 %v785
    %v907 = vunpack.c.l.b16 %v786
    %v908 = vpack.c.b16 %v901, %v900
    %v909 = vpack.c.b16 %v903, %v902
    %v910 = vpack.c.b16 %v905, %v904
    %v911 = vpack.c.b16 %v907, %v906
    %v917 = vsel %vm764, %v778, 0
    %919 = vmatprep.subr.bf16.mxu0 0
    %920 = vmatpush1.bf16.msra.mxu0 %v908
    %921 = vmatprep.subr.bf16.mxu0 0
    %922 = vmatpush1.bf16.msra.mxu0 %v909
    %923 = vmatprep.subr.bf16.mxu0 0
    %924 = vmatpush1.bf16.msra.mxu0 %v910
    %925 = vmatprep.subr.bf16.mxu0 0
    %926 = vmatpush1.bf16.msra.mxu0 %v911
    %927 = vmatprep.subr.bf16.mxu0 0
    %928 = vmatpush1.bf16.msra.mxu0 0
    %929 = vmatprep.subr.bf16.mxu0 0
    %930 = vmatpush1.bf16.msra.mxu0 0
    %931 = vmatprep.subr.bf16.mxu0 0
    %932 = vmatpush1.bf16.msra.mxu0 0
    %933 = vmatprep.subr.bf16.mxu0 0
    %934 = vmatpush1.bf16.msra.mxu0 0
    %935 = vmatprep.subr.bf16.mxu0 0
    %936 = vmatpush1.bf16.msra.mxu0 0
    %937 = vmatprep.subr.bf16.mxu0 0
    %938 = vmatpush1.bf16.msra.mxu0 0
    %939 = vmatprep.subr.bf16.mxu0 0
    %940 = vmatpush1.bf16.msra.mxu0 0
    %941 = vmatprep.subr.bf16.mxu0 0
    %942 = vmatpush1.bf16.msra.mxu0 0
    %943 = vmatprep.subr.bf16.mxu0 0
    %944 = vmatpush1.bf16.msra.mxu0 0
    %945 = vmatprep.subr.bf16.mxu0 0
    %946 = vmatpush1.bf16.msra.mxu0 0
    %947 = vmatprep.subr.bf16.mxu0 0
    %948 = vmatpush1.bf16.msra.mxu0 0
    %949 = vmatprep.subr.bf16.mxu0 0
    %950 = vmatpush1.bf16.msra.mxu0 0
    %951 = vmatprep.mubr.bf16.mxu0 0
    %952 = vmatmul.mubr.bf16.gmra.mrb[0].mxu0 %v917
    %v953 = vpop.f32.mrb[0].mxu0
    %v954 = vadd.f32 %v887, %v953
    %v955 = vpop.f32.mrb[0].mxu0
    %v956 = vpop.f32.mrb[0].mxu0
    %v957 = vpop.f32.mrb[0].mxu0
    %958 = vdwg.mxu0
    %v959 = vld [vmem:[#allocation11] sm:$0x1]
    %v961 = vlaneseq
    %v962 = vshrl.u32 %v961, 7
    %v963 = vsub.s32 0, %v962
    %v964 = vrot.slane %v959, %v963
    %v966 = vadd.f32 %v954, %v964
    %v967 = vmax.f32 %v966, 0.0
    %vm968 = vcmp.ne.f32.partialorder %v966, %v966
    %v969 = vadd.f32 %v966, 0.0
    %v970 = vand.u32 2147483647, %v966
    %v971 = vsub.f32 0.0, %v970
    %v972 = vmul.f32 %v971, 1.442695
    %v973 = vpow.pop %v972
    %v974 = vadd.f32 %v973, 1.0
    %v975 = vlog2.pop %v974
    %v976 = vmul.f32 %v975, 0.6931472
    %v977 = vmul.f32 -0.5, %v973
    %v978 = vadd.f32 %v977, 1.0
    %v979 = vmul.f32 %v978, %v973
    %v980 = vand.u32 2147483647, %v973
    %vm981 = vcmp.lt.f32.partialorder %v980, 0.0004427343
    %v982 = vsel %vm981, %v979, %v976
    %v983 = vadd.f32 %v967, %v982
    %v984 = vsel %vm968, %v969, %v983
    %v985 = vpack.c.bf16 %v984, %v984
    %v986 = vld [vmem:[%s13] sm:$0xff]
    %v987 = vld [vmem:[%s13 + $0x8] sm:$0xff]
    %v988 = vld [vmem:[%s13 + $0x10] sm:$0xff]
    %v989 = vld [vmem:[%s13 + $0x18] sm:$0xff]
    %v990 = vld [vmem:[%s13 + $0x20] sm:$0xff]
    %v991 = vld [vmem:[%s13 + $0x28] sm:$0xff]
    %v992 = vld [vmem:[%s13 + $0x30] sm:$0xff]
    %v993 = vld [vmem:[%s13 + $0x38] sm:$0xff]
    %v994 = vld [vmem:[%s13 + $0x40] sm:$0xff]
    %v995 = vld [vmem:[%s13 + $0x48] sm:$0xff]
    %v996 = vld [vmem:[%s13 + $0x50] sm:$0xff]
    %v997 = vld [vmem:[%s13 + $0x58] sm:$0xff]
    %v998 = vld [vmem:[%s13 + $0x60] sm:$0xff]
    %v999 = vld [vmem:[%s13 + $0x68] sm:$0xff]
    %v1000 = vld [vmem:[%s13 + $0x70] sm:$0xff]
    %v1001 = vld [vmem:[%s13 + $0x78] sm:$0xff]
    %v1002 = vld [vmem:[%s14] sm:$0x3]
    %v1004 = vlaneseq
    %v1005 = vshrl.u32 %v1004, 7
    %v1006 = vsub.s32 0, %v1005
    %v1007 = vrot.slane %v1002, %v1006
    %v1008 = vlaneseq
    %v1009 = vshrl.u32 %v1008, 7
    %v1010 = vsub.s32 1, %v1009
    %v1011 = vrot.slane %v1002, %v1010
    %v1030 = vunpack.c.l.b16 %v986
    %v1031 = vunpack.c.h.b16 %v986
    %v1032 = vunpack.c.l.b16 %v987
    %v1033 = vunpack.c.h.b16 %v987
    %v1034 = vunpack.c.l.b16 %v988
    %v1035 = vunpack.c.h.b16 %v988
    %v1036 = vunpack.c.l.b16 %v989
    %v1037 = vunpack.c.h.b16 %v989
    %v1038 = vunpack.c.l.b16 %v990
    %v1039 = vunpack.c.h.b16 %v990
    %v1040 = vunpack.c.l.b16 %v991
    %v1041 = vunpack.c.h.b16 %v991
    %v1042 = vunpack.c.l.b16 %v992
    %v1043 = vunpack.c.h.b16 %v992
    %v1044 = vunpack.c.l.b16 %v993
    %v1045 = vunpack.c.h.b16 %v993
    %v1046 = vunpack.c.l.b16 %v994
    %v1047 = vunpack.c.h.b16 %v994
    %v1048 = vunpack.c.l.b16 %v995
    %v1049 = vunpack.c.h.b16 %v995
    %v1050 = vunpack.c.l.b16 %v996
    %v1051 = vunpack.c.h.b16 %v996
    %v1052 = vunpack.c.l.b16 %v997
    %v1053 = vunpack.c.h.b16 %v997
    %v1054 = vunpack.c.l.b16 %v998
    %v1055 = vunpack.c.h.b16 %v998
    %v1056 = vunpack.c.l.b16 %v999
    %v1057 = vunpack.c.h.b16 %v999
    %v1058 = vunpack.c.l.b16 %v1000
    %v1059 = vunpack.c.h.b16 %v1000
    %v1060 = vunpack.c.l.b16 %v1001
    %v1061 = vunpack.c.h.b16 %v1001
    %v1062 = vpack.c.b16 %v1032, %v1030
    %v1063 = vpack.c.b16 %v1033, %v1031
    %v1064 = vpack.c.b16 %v1036, %v1034
    %v1065 = vpack.c.b16 %v1037, %v1035
    %v1066 = vpack.c.b16 %v1040, %v1038
    %v1067 = vpack.c.b16 %v1041, %v1039
    %v1068 = vpack.c.b16 %v1044, %v1042
    %v1069 = vpack.c.b16 %v1045, %v1043
    %v1070 = vpack.c.b16 %v1048, %v1046
    %v1071 = vpack.c.b16 %v1049, %v1047
    %v1072 = vpack.c.b16 %v1052, %v1050
    %v1073 = vpack.c.b16 %v1053, %v1051
    %v1074 = vpack.c.b16 %v1056, %v1054
    %v1075 = vpack.c.b16 %v1057, %v1055
    %v1076 = vpack.c.b16 %v1060, %v1058
    %v1077 = vpack.c.b16 %v1061, %v1059
    %1094 = vmatprep.subr.bf16.mxu0 %v1063
    %1095 = vmatpush1.bf16.msra.mxu0 %v1062
    %1096 = vmatprep.subr.bf16.mxu0 %v1065
    %1097 = vmatpush1.bf16.msra.mxu0 %v1064
    %1098 = vmatprep.subr.bf16.mxu0 %v1067
    %1099 = vmatpush1.bf16.msra.mxu0 %v1066
    %1100 = vmatprep.subr.bf16.mxu0 %v1069
    %1101 = vmatpush1.bf16.msra.mxu0 %v1068
    %1102 = vmatprep.subr.bf16.mxu0 %v1071
    %1103 = vmatpush1.bf16.msra.mxu0 %v1070
    %1104 = vmatprep.subr.bf16.mxu0 %v1073
    %1105 = vmatpush1.bf16.msra.mxu0 %v1072
    %1106 = vmatprep.subr.bf16.mxu0 %v1075
    %1107 = vmatpush1.bf16.msra.mxu0 %v1074
    %1108 = vmatprep.subr.bf16.mxu0 %v1077
    %1109 = vmatpush1.bf16.msra.mxu0 %v1076
    %1110 = vmatprep.subr.bf16.mxu0 0
    %1111 = vmatpush1.bf16.msra.mxu0 0
    %1112 = vmatprep.subr.bf16.mxu0 0
    %1113 = vmatpush1.bf16.msra.mxu0 0
    %1114 = vmatprep.subr.bf16.mxu0 0
    %1115 = vmatpush1.bf16.msra.mxu0 0
    %1116 = vmatprep.subr.bf16.mxu0 0
    %1117 = vmatpush1.bf16.msra.mxu0 0
    %1118 = vmatprep.subr.bf16.mxu0 0
    %1119 = vmatpush1.bf16.msra.mxu0 0
    %1120 = vmatprep.subr.bf16.mxu0 0
    %1121 = vmatpush1.bf16.msra.mxu0 0
    %1122 = vmatprep.subr.bf16.mxu0 0
    %1123 = vmatpush1.bf16.msra.mxu0 0
    %1124 = vmatprep.subr.bf16.mxu0 0
    %1125 = vmatpush1.bf16.msra.mxu0 0
    %1126 = vmatprep.mubr.bf16.mxu0 0
    %1127 = vmatmul.mubr.bf16.gmra.mrb[0].mxu0 %v985
    %v1128 = vpop.f32.mrb[0].mxu0
    %v1129 = vadd.f32 %v1007, %v1128
    %v1130 = vpop.f32.mrb[0].mxu0
    %v1131 = vadd.f32 %v1011, %v1130
    %v1132 = vpop.f32.mrb[0].mxu0
    %v1133 = vpop.f32.mrb[0].mxu0
    %1134 = vdwg.mxu0
    %v1135 = vxor.u32 %v1129, 2147483648
    %v1136 = vxor.u32 %v1131, 2147483648
    %v1137 = vmul.f32 %v1135, 1.442695
    %v1138 = vpow.pop %v1137
    %v1139 = vmul.f32 %v1136, 1.442695
    %v1140 = vpow.pop %v1139
    %v1141 = vadd.f32 %v1138, 1.0
    %v1142 = vadd.f32 %v1140, 1.0
    %v1143 = vrcp.pop %v1141
    %v1144 = vmul.f32 1.0, %v1143
    %v1145 = vrcp.pop %v1142
    %v1146 = vmul.f32 1.0, %v1145
    %1147 = vst [vmem:[#allocation13] sm:$0xff] %v1144
    %1148 = vst [vmem:[#allocation13 + $0x8] sm:$0xff] %v1146
    // Predicated region
    $region86: #{tpu_custom_call.1} parent=1 // pred_check
      _
    $region87: #{tpu_custom_call.1} parent=1 // pred_check_branch
      %1150 = sbr.rel (0) target = $region89
    $region88: #{tpu_custom_call.1} parent=1 // pred_region
      %s1152 = ssub.s32 256, 256
      %1153 = vsyncadd [#allocation4], %s1152
      %s1155 = sshll.u32 [#allocation13], 4
      %s1156 = int_to_ptr.vmem [resolvable:$true] %s1155
      %1158 = dma.vmem_to_hbm [thread:$0]  %s1156, 256, %s15, [#allocation4]
    $region89: #{tpu_custom_call.1} parent=1 // pred_fallthru
      _
    // Predicated region
    $region90: #{tpu_custom_call.1} parent=1 // pred_check
      _
    $region91: #{tpu_custom_call.1} parent=1 // pred_check_branch
      %1160 = sbr.rel (0) target = $region93
    $region92: #{tpu_custom_call.1} parent=1 // pred_region
      %s1162 = ssub.s32 128, 128
      %1163 = vsyncadd [#allocation15], %s1162
      %s1165 = sshll.u32 [#allocation14], 4
      %s1166 = int_to_ptr.vmem [resolvable:$true] %s1165
      %1168 = dma.vmem_to_hbm [thread:$0]  %s1166, 128, %s16, [#allocation15]
    $region93: #{tpu_custom_call.1} parent=1 // pred_fallthru
      _
    // Predicated region
    $region94: #{tpu_custom_call.1} parent=1 // pred_check
      _
    $region95: #{tpu_custom_call.1} parent=1 // pred_check_branch
      %1170 = sbr.rel (0) target = $region97
    $region96: #{tpu_custom_call.1} parent=1 // pred_region
      %s1172 = ssub.s32 128, 128
      %1173 = vsyncadd [#allocation15], %s1172
      %s1175 = sshll.u32 [#allocation16], 4
      %s1176 = int_to_ptr.vmem [resolvable:$true] %s1175
      %1178 = dma.vmem_to_hbm [thread:$0]  %s1176, 128, %s17, [#allocation15]
    $region97: #{tpu_custom_call.1} parent=1 // pred_fallthru
      _
    // Predicated region
    $region98: #{tpu_custom_call.1} parent=1 // pred_check
      _
    $region99: #{tpu_custom_call.1} parent=1 // pred_check_branch
      %1180 = sbr.rel (0) target = $region101
    $region100: #{tpu_custom_call.1} parent=1 // pred_region
      %1181 = dma.done [#allocation4], 256
    $region101: #{tpu_custom_call.1} parent=1 // pred_fallthru
      _
    // Predicated region
    $region102: #{tpu_custom_call.1} parent=1 // pred_check
      _
    $region103: #{tpu_custom_call.1} parent=1 // pred_check_branch
      %1183 = sbr.rel (0) target = $region105
    $region104: #{tpu_custom_call.1} parent=1 // pred_region
      %1184 = dma.done [#allocation15], 128
    $region105: #{tpu_custom_call.1} parent=1 // pred_fallthru
      _
    // Predicated region
    $region106: #{tpu_custom_call.1} parent=1 // pred_check
      _
    $region107: #{tpu_custom_call.1} parent=1 // pred_check_branch
      %1186 = sbr.rel (0) target = $region109
    $region108: #{tpu_custom_call.1} parent=1 // pred_region
      %1187 = dma.done [#allocation15], 128
    $region109: #{tpu_custom_call.1} parent=1 // pred_fallthru
      _
    %1188 = vsyncpa [#allocation3], 1
    %1189 = vsyncpa [#allocation6], 1
    %1190 = vsyncpa [#allocation9], 1
    %1191 = vsyncpa [#allocation12], 1
    %1192 = vsyncpa [#allocation4], 1
    %1193 = vsyncpa [#allocation15], 1

</llo_original>
